<compile_context>
chip_gen: v6e
topology: v6e:2x2x1
jax: 0.10.0
libtpu: 0.0.40
codegen_flags: <defaults>
</compile_context>

<pallas_src>
import numpy as np
import jax
import jax.numpy as jnp
from jax.experimental import pallas as pl
from jax.experimental.pallas import tpu as pltpu

# ---- module hyper-parameters (SSIM.__init__ defaults) ----
WIN_SIZE = 11
WIN_SIGMA = 1.5
DATA_RANGE = 1.0
K1, K2 = 0.01, 0.03
C1 = (K1 * DATA_RANGE) ** 2
C2 = (K2 * DATA_RANGE) ** 2

SUBLANE = 8


def _fspecial_gauss_1d(size, sigma):
    """Deterministic 1-D Gaussian window, matches the PyTorch helper."""
    coords = np.arange(size, dtype=np.float32) - size // 2
    g = np.exp(-(coords ** 2) / (2.0 * sigma ** 2))
    g = g / g.sum()
    return g.astype(np.float32)


GAUSS = _fspecial_gauss_1d(WIN_SIZE, WIN_SIGMA)


def _valid_conv_matrix(H, W):
    """Combined separable 2-D Gaussian as a (H*W, Hout*Wout) valid-conv matrix.

    out[(i, o)] = sum_{l,k} g[l] * g[k] * x[(i+l, o+k)]   <=>   x_flat @ G2
    (identical math to conv along W then conv along H with the same 1-D taps).
    """
    Hout = H - WIN_SIZE + 1
    Wout = W - WIN_SIZE + 1
    g = GAUSS.astype(np.float64)
    G2 = np.zeros((H * W, Hout * Wout), dtype=np.float64)
    for i in range(Hout):
        for o in range(Wout):
            col = i * Wout + o
            for l in range(WIN_SIZE):
                row = (i + l) * W
                for k in range(WIN_SIZE):
                    G2[row + (o + k), col] = g[l] * g[k]
    return G2.astype(np.float32)


def _make_ssim_kernel(B, Cpad, HW, P):
    M = B * Cpad
    inv_count = np.float32(1.0 / P)  # hoisted compile-time scalar (no jnp.full)

    def kernel(x_ref, y_ref, g2_ref, out_ref):
        # (B, Cpad, HW) batch block -> (B*Cpad, HW).  Cpad is a multiple of 8,
        # so the leading-dim collapse is layout-free and every operand chunk /
        # later F slice starts on an 8-sublane tile boundary.
        X = x_ref[...].astype(jnp.float32).reshape(M, HW)
        Y = y_ref[...].astype(jnp.float32).reshape(M, HW)
        G2 = g2_ref[...]                                            # (HW, P)

        # All six gaussian_filter() calls of the reference as ONE MXU matmul:
        # five operands stacked along the M axis (M = 5*B*Cpad rows).
        stack = jnp.concatenate([X, Y, X * X, Y * Y, X * Y], axis=0)   # (5M, HW)
        F = jnp.dot(stack, G2, preferred_element_type=jnp.float32)     # (5M, P)

        mu1 = F[0 * M:1 * M]
        mu2 = F[1 * M:2 * M]
        exx = F[2 * M:3 * M]
        eyy = F[3 * M:4 * M]
        exy = F[4 * M:5 * M]

        mu1_sq = mu1 * mu1
        mu2_sq = mu2 * mu2
        mu1_mu2 = mu1 * mu2
        sigma1_sq = exx - mu1_sq
        sigma2_sq = eyy - mu2_sq
        sigma12 = exy - mu1_mu2

        cs_map = (2.0 * sigma12 + C2) / (sigma1_sq + sigma2_sq + C2)
        ssim_map = (2.0 * mu1_mu2 + C1) / (mu1_sq + mu2_sq + C1) * cs_map  # (M, P)

        # Per-channel spatial mean: lane-axis XLU reduce (MXU stays free) times
        # a compile-time 1/P scalar; ReLU for nonnegative_ssim=True.  Output is
        # lane-dense (channels along lanes), not a width-1 column.
        ssim_pc = jnp.sum(ssim_map.reshape(B, Cpad, P), axis=-1) * inv_count
        out_ref[...] = jnp.maximum(ssim_pc, 0.0).reshape(1, B, Cpad)

    return kernel


def _pick_batch_block(N, Cpad, HW, P):
    """Largest divisor of N whose per-step f32 working set stays well inside
    the scoped-VMEM budget: fewer grid steps (amortized pipeline overhead) and
    a larger MXU M dimension.
    """
    # TODO(synk): on v7x prefer ~ceil(N/2) blocks so both TensorCores get a
    # parallel grid step; here N=2 collapses to one step.
    budget = 8 * 1024 * 1024
    per_b = 4 * Cpad * (2 * 2 * HW + 5 * HW + 10 * P)  # in bufs + stack + epilogue
    b = int(max(1, min(N, budget // max(per_b, 1))))
    while N % b:
        b -= 1
    return b


def ssim_pallas(X, Y):
    """Equivalent of SSIM(...).forward(X, Y) with data_range=1, win_size=11,
    win_sigma=1.5, K=(0.01, 0.03), nonnegative_ssim=True, size_average=True."""
    assert X.shape == Y.shape and X.ndim == 4
    N, C_ch, H, W = X.shape
    assert H >= WIN_SIZE and W >= WIN_SIZE
    HW = H * W
    P = (H - WIN_SIZE + 1) * (W - WIN_SIZE + 1)
    Cpad = ((C_ch + SUBLANE - 1) // SUBLANE) * SUBLANE

    # Compile-time constant combined Gaussian valid-conv matrix.
    # TODO(synk): for realistic (>~64x64) images replace this dense O(H^2*W^2)
    # matrix with the separable two-matmul factorization ((W,Wout) then
    # (Hout,H)) and tile the output-pixel axis; the dense form would not fit
    # VMEM (v7x 64 MiB first).
    G2 = jnp.asarray(_valid_conv_matrix(H, W))      # (HW, P) f32

    # Flatten spatial dims (free row-major reshape) and zero-pad channels to a
    # multiple of 8 sublanes so every stacked chunk / F slice is tile-aligned.
    Xr = X.reshape(N, C_ch, HW)
    Yr = Y.reshape(N, C_ch, HW)
    if Cpad != C_ch:
        pad = ((0, 0), (0, Cpad - C_ch), (0, 0))
        Xr = jnp.pad(Xr, pad)
        Yr = jnp.pad(Yr, pad)

    B = _pick_batch_block(N, Cpad, HW, P)
    n_blocks = N // B
    kernel = _make_ssim_kernel(B, Cpad, HW, P)

    ssim_pc = pl.pallas_call(
        kernel,
        out_shape=jax.ShapeDtypeStruct((n_blocks, B, Cpad), jnp.float32),
        grid=(n_blocks,),
        in_specs=[
            pl.BlockSpec((B, Cpad, HW), lambda n: (n, 0, 0)),
            pl.BlockSpec((B, Cpad, HW), lambda n: (n, 0, 0)),
            pl.BlockSpec((HW, P), lambda n: (0, 0)),   # grid-invariant block
        ],
        out_specs=pl.BlockSpec((1, B, Cpad), lambda n: (n, 0, 0)),
        compiler_params=pltpu.CompilerParams(
            dimension_semantics=("parallel",),
            vmem_limit_bytes=32 * 1024 * 1024),
    )(Xr, Yr, G2)

    # Padded channels evaluate to ssim == 1; drop them before the final mean.
    # size_average=True -> scalar mean over (N, C): tiny glue reduce kept
    # outside so the batch grid axis stays megacore-parallel.
    ssim_pc = ssim_pc.reshape(N, Cpad)[:, :C_ch]
    return jnp.mean(ssim_pc)


def ssim_reference(X, Y):
    """Pure-JAX reference faithful to the PyTorch separable-filter order."""
    N, C_ch, H, W = X.shape
    Hout = H - WIN_SIZE + 1
    Wout = W - WIN_SIZE + 1
    g = jnp.asarray(GAUSS)

    def gf(img):
        acc = g[0] * img[:, :, :, 0:Wout]
        for k in range(1, WIN_SIZE):
            acc = acc + g[k] * img[:, :, :, k:k + Wout]
        acc2 = g[0] * acc[:, :, 0:Hout, :]
        for k in range(1, WIN_SIZE):
            acc2 = acc2 + g[k] * acc[:, :, k:k + Hout, :]
        return acc2

    mu1, mu2 = gf(X), gf(Y)
    mu1_sq, mu2_sq, mu1_mu2 = mu1 * mu1, mu2 * mu2, mu1 * mu2
    sigma1_sq = gf(X * X) - mu1_sq
    sigma2_sq = gf(Y * Y) - mu2_sq
    sigma12 = gf(X * Y) - mu1_mu2
    cs_map = (2 * sigma12 + C2) / (sigma1_sq + sigma2_sq + C2)
    ssim_map = (2 * mu1_mu2 + C1) / (mu1_sq + mu2_sq + C1) * cs_map
    ssim_pc = jnp.maximum(ssim_map.reshape(N, C_ch, -1).mean(-1), 0.0)
    return jnp.mean(ssim_pc)


if __name__ == "__main__":
    key = jax.random.PRNGKey(0)
    kx, ky = jax.random.split(key)
    N, C_ch, H, W = 2, 4, 16, 16  # SSIM(channel=4) applied to (2,4,16,16) images
    X = jax.random.uniform(kx, (N, C_ch, H, W), dtype=jnp.float32)
    Y = jax.random.uniform(ky, (N, C_ch, H, W), dtype=jnp.float32)

    out = jax.block_until_ready(ssim_pallas(X, Y))
    ref = jax.block_until_ready(ssim_reference(X, Y))

    assert np.isfinite(float(out))
    np.testing.assert_allclose(np.asarray(out), np.asarray(ref),
                               rtol=1e-4, atol=1e-5)
    print("KERNEL_OK")
</pallas_src>

<mosaic_0001>
module attributes {stable_mosaic.version = 11 : i64} {
  func.func @kernel(%arg0: i32, %arg1: memref<2x8x256xf32, #tpu.memory_space<vmem>>, %arg2: memref<2x8x256xf32, #tpu.memory_space<vmem>>, %arg3: memref<256x36xf32, #tpu.memory_space<vmem>>, %arg4: memref<1x2x8xf32, #tpu.memory_space<vmem>>) attributes {dimension_semantics = [#tpu.dimension_semantics<parallel>], iteration_bounds = array<i64: 1>, scalar_prefetch = 0 : i64, scratch_operands = 0 : i64, tpu.core_type = #tpu.core_type<tc>, window_params = [{transform_indices = @transform_0, window_bounds = array<i64: 2, 8, 256>}, {transform_indices = @transform_1, window_bounds = array<i64: 2, 8, 256>}, {pipeline_mode = #tpu.pipeline_mode<synchronous>, transform_indices = @transform_2, window_bounds = array<i64: 256, 36>}, {transform_indices = @transform_3, window_bounds = array<i64: 1, 2, 8>}]} {
    %c0 = arith.constant 0 : index
    %c0_0 = arith.constant 0 : index
    %c0_1 = arith.constant 0 : index
    %0 = vector.load %arg1[%c0, %c0_0, %c0_1] : memref<2x8x256xf32, #tpu.memory_space<vmem>>, vector<2x8x256xf32>
    %1 = vector.shape_cast %0 : vector<2x8x256xf32> to vector<16x256xf32>
    %c0_2 = arith.constant 0 : index
    %c0_3 = arith.constant 0 : index
    %c0_4 = arith.constant 0 : index
    %2 = vector.load %arg2[%c0_2, %c0_3, %c0_4] : memref<2x8x256xf32, #tpu.memory_space<vmem>>, vector<2x8x256xf32>
    %3 = vector.shape_cast %2 : vector<2x8x256xf32> to vector<16x256xf32>
    %c0_5 = arith.constant 0 : index
    %c0_6 = arith.constant 0 : index
    %4 = vector.load %arg3[%c0_5, %c0_6] : memref<256x36xf32, #tpu.memory_space<vmem>>, vector<256x36xf32>
    %5 = arith.mulf %1, %1 : vector<16x256xf32>
    %6 = arith.mulf %3, %3 : vector<16x256xf32>
    %7 = arith.mulf %1, %3 : vector<16x256xf32>
    %8 = tpu.concatenate %1, %3, %5, %6, %7 in 0 : vector<16x256xf32>, vector<16x256xf32>, vector<16x256xf32>, vector<16x256xf32>, vector<16x256xf32> -> vector<80x256xf32>
    %cst = arith.constant dense<0.000000e+00> : vector<80x36xf32>
    %9 = tpu.matmul %8, %4, %cst {dimension_numbers = #tpu.dot_dimension_numbers<[1], [0], [0], [1], [0, 0, 1, 1], [], []>} : vector<80x256xf32>, vector<256x36xf32>, vector<80x36xf32> -> vector<80x36xf32>
    %10 = vector.extract_strided_slice %9 {offsets = [0, 0], sizes = [16, 36], strides = [1, 1]} : vector<80x36xf32> to vector<16x36xf32>
    %11 = vector.extract_strided_slice %9 {offsets = [16, 0], sizes = [16, 36], strides = [1, 1]} : vector<80x36xf32> to vector<16x36xf32>
    %12 = vector.extract_strided_slice %9 {offsets = [32, 0], sizes = [16, 36], strides = [1, 1]} : vector<80x36xf32> to vector<16x36xf32>
    %13 = vector.extract_strided_slice %9 {offsets = [48, 0], sizes = [16, 36], strides = [1, 1]} : vector<80x36xf32> to vector<16x36xf32>
    %14 = vector.extract_strided_slice %9 {offsets = [64, 0], sizes = [16, 36], strides = [1, 1]} : vector<80x36xf32> to vector<16x36xf32>
    %15 = arith.mulf %10, %10 : vector<16x36xf32>
    %16 = arith.mulf %11, %11 : vector<16x36xf32>
    %17 = arith.mulf %10, %11 : vector<16x36xf32>
    %18 = arith.subf %12, %15 : vector<16x36xf32>
    %19 = arith.subf %13, %16 : vector<16x36xf32>
    %20 = arith.subf %14, %17 : vector<16x36xf32>
    %cst_7 = arith.constant 2.000000e+00 : f32
    %21 = vector.broadcast %cst_7 : f32 to vector<16x36xf32>
    %22 = arith.mulf %21, %20 : vector<16x36xf32>
    %cst_8 = arith.constant 8.99999984E-4 : f32
    %23 = vector.broadcast %cst_8 : f32 to vector<16x36xf32>
    %24 = arith.addf %22, %23 : vector<16x36xf32>
    %25 = arith.addf %18, %19 : vector<16x36xf32>
    %cst_9 = arith.constant 8.99999984E-4 : f32
    %26 = vector.broadcast %cst_9 : f32 to vector<16x36xf32>
    %27 = arith.addf %25, %26 : vector<16x36xf32>
    %28 = arith.divf %24, %27 : vector<16x36xf32>
    %cst_10 = arith.constant 2.000000e+00 : f32
    %29 = vector.broadcast %cst_10 : f32 to vector<16x36xf32>
    %30 = arith.mulf %29, %17 : vector<16x36xf32>
    %cst_11 = arith.constant 9.99999974E-5 : f32
    %31 = vector.broadcast %cst_11 : f32 to vector<16x36xf32>
    %32 = arith.addf %30, %31 : vector<16x36xf32>
    %33 = arith.addf %15, %16 : vector<16x36xf32>
    %cst_12 = arith.constant 9.99999974E-5 : f32
    %34 = vector.broadcast %cst_12 : f32 to vector<16x36xf32>
    %35 = arith.addf %33, %34 : vector<16x36xf32>
    %36 = arith.divf %32, %35 : vector<16x36xf32>
    %37 = arith.mulf %36, %28 : vector<16x36xf32>
    %38 = vector.shape_cast %37 : vector<16x36xf32> to vector<2x8x36xf32>
    %cst_13 = arith.constant dense<0.000000e+00> : vector<2x8xf32>
    %39 = vector.multi_reduction <add>, %38, %cst_13 [2] : vector<2x8x36xf32> to vector<2x8xf32>
    %cst_14 = arith.constant 0.027777778 : f32
    %40 = vector.broadcast %cst_14 : f32 to vector<2x8xf32>
    %41 = arith.mulf %39, %40 : vector<2x8xf32>
    %cst_15 = arith.constant 0.000000e+00 : f32
    %42 = vector.broadcast %cst_15 : f32 to vector<2x8xf32>
    %43 = arith.maximumf %41, %42 : vector<2x8xf32>
    %44 = vector.shape_cast %43 : vector<2x8xf32> to vector<1x2x8xf32>
    %c0_16 = arith.constant 0 : index
    %c0_17 = arith.constant 0 : index
    %c0_18 = arith.constant 0 : index
    %45 = vector.load %arg4[%c0_16, %c0_17, %c0_18] : memref<1x2x8xf32, #tpu.memory_space<vmem>>, vector<1x2x8xf32>
    tpu.vector_store %arg4[%c0_16, %c0_17, %c0_18], %44 {strides = array<i32>} : memref<1x2x8xf32, #tpu.memory_space<vmem>>, vector<1x2x8xf32>,
    return
  }
  func.func @transform_0(%arg0: i32) -> (i32, i32, i32) {
    %c0_i32 = arith.constant 0 : i32
    %c0_i32_0 = arith.constant 0 : i32
    %c0_i32_1 = arith.constant 0 : i32
    return %arg0, %c0_i32, %c0_i32_0 : i32, i32, i32
  }
  func.func @transform_1(%arg0: i32) -> (i32, i32, i32) {
    %c0_i32 = arith.constant 0 : i32
    %c0_i32_0 = arith.constant 0 : i32
    %c0_i32_1 = arith.constant 0 : i32
    return %arg0, %c0_i32, %c0_i32_0 : i32, i32, i32
  }
  func.func @transform_2(%arg0: i32) -> (i32, i32) {
    %c0_i32 = arith.constant 0 : i32
    %c0_i32_0 = arith.constant 0 : i32
    %c0_i32_1 = arith.constant 0 : i32
    return %c0_i32, %c0_i32_0 : i32, i32
  }
  func.func @transform_3(%arg0: i32) -> (i32, i32, i32) {
    %c0_i32 = arith.constant 0 : i32
    %c0_i32_0 = arith.constant 0 : i32
    %c0_i32_1 = arith.constant 0 : i32
    return %arg0, %c0_i32, %c0_i32_0 : i32, i32, i32
  }
}

</mosaic_0001>

<llo_original>
// kernel: tpu_custom_call.1
$region0: #{tpu_custom_call.1}
  #allocation0 [shape = 'u32[]', space=smem, size = 0x4, offset = 0x4, fixed_abs, tag = 'smem constant byte address 0x4 - core index']
  #allocation1 [shape = 'u32[144,128]{1,0:T(1,128)}', space=vmem, size = 0x12000, scoped, tag = 'internal scratch']
  %s0 = inlined_call_operand.vmem [shape: f32[2,8,256], index: 0, kind: input, shape index: {}]
  %s1 = inlined_call_operand.vmem [shape: f32[2,8,256], index: 1, kind: input, shape index: {}]
  %s2 = inlined_call_operand.vmem [shape: f32[256,36], index: 2, kind: input, shape index: {}]
  %s3 = inlined_call_operand.hbm [shape: f32[1,2,8], index: 3, kind: output, shape index: {}]
  %s4 = sld [smem:[#allocation0]]
  $region22: #{tpu_custom_call.1} parent=0
    _
  %s6 = ssub.s32 1, %s4
  %s7 = scalar_select 0, %s6, %s4
  $region1: #{tpu_custom_call.1} parent=0
    #allocation2 [shape = 'u8[1024]{0}', space=vmem, size = 0x400, scoped, tag = 'output window, operand 0, single buffered']
    #allocation3 [shape = 's32[1]{0}', space=sflag, size = 0x4, scoped, tag = 'scoped memory for tpu_custom_call.1']
    %8 = vsyncpa [#allocation3], 0
    // Predicated region
    $region2: #{tpu_custom_call.1} parent=1 // pred_check
      _
    $region3: #{tpu_custom_call.1} parent=1 // pred_check_branch
      %10 = sbr.rel (0) target = $region5
    $region4: #{tpu_custom_call.1} parent=1 // pred_region
      _
    $region5: #{tpu_custom_call.1} parent=1 // pred_fallthru
      _
    // Predicated region
    $region6: #{tpu_custom_call.1} parent=1 // pred_check
      _
    $region7: #{tpu_custom_call.1} parent=1 // pred_check_branch
      %12 = sbr.rel (0) target = $region9
    $region8: #{tpu_custom_call.1} parent=1 // pred_region
      _
    $region9: #{tpu_custom_call.1} parent=1 // pred_fallthru
      _
    // Predicated region
    $region10: #{tpu_custom_call.1} parent=1 // pred_check
      _
    $region11: #{tpu_custom_call.1} parent=1 // pred_check_branch
      %14 = sbr.rel (0) target = $region13
    $region12: #{tpu_custom_call.1} parent=1 // pred_region
      _
    $region13: #{tpu_custom_call.1} parent=1 // pred_fallthru
      _
    %v15 = vld [vmem:[%s0] sm:$0xff]
    %v16 = vld [vmem:[%s0 + $0x8] sm:$0xff]
    %v17 = vld [vmem:[%s0 + $0x10] sm:$0xff]
    %v18 = vld [vmem:[%s0 + $0x18] sm:$0xff]
    %v19 = vld [vmem:[%s1] sm:$0xff]
    %v20 = vld [vmem:[%s1 + $0x8] sm:$0xff]
    %v21 = vld [vmem:[%s1 + $0x10] sm:$0xff]
    %v22 = vld [vmem:[%s1 + $0x18] sm:$0xff]
    %v23 = vld [vmem:[%s2] sm:$0xff]
    %v24 = vld [vmem:[%s2 + $0x8] sm:$0xff]
    %v25 = vld [vmem:[%s2 + $0x10] sm:$0xff]
    %v26 = vld [vmem:[%s2 + $0x18] sm:$0xff]
    %v27 = vld [vmem:[%s2 + $0x20] sm:$0xff]
    %v28 = vld [vmem:[%s2 + $0x28] sm:$0xff]
    %v29 = vld [vmem:[%s2 + $0x30] sm:$0xff]
    %v30 = vld [vmem:[%s2 + $0x38] sm:$0xff]
    %v31 = vld [vmem:[%s2 + $0x40] sm:$0xff]
    %v32 = vld [vmem:[%s2 + $0x48] sm:$0xff]
    %v33 = vld [vmem:[%s2 + $0x50] sm:$0xff]
    %v34 = vld [vmem:[%s2 + $0x58] sm:$0xff]
    %v35 = vld [vmem:[%s2 + $0x60] sm:$0xff]
    %v36 = vld [vmem:[%s2 + $0x68] sm:$0xff]
    %v37 = vld [vmem:[%s2 + $0x70] sm:$0xff]
    %v38 = vld [vmem:[%s2 + $0x78] sm:$0xff]
    %v39 = vld [vmem:[%s2 + $0x80] sm:$0xff]
    %v40 = vld [vmem:[%s2 + $0x88] sm:$0xff]
    %v41 = vld [vmem:[%s2 + $0x90] sm:$0xff]
    %v42 = vld [vmem:[%s2 + $0x98] sm:$0xff]
    %v43 = vld [vmem:[%s2 + $0xa0] sm:$0xff]
    %v44 = vld [vmem:[%s2 + $0xa8] sm:$0xff]
    %v45 = vld [vmem:[%s2 + $0xb0] sm:$0xff]
    %v46 = vld [vmem:[%s2 + $0xb8] sm:$0xff]
    %v47 = vld [vmem:[%s2 + $0xc0] sm:$0xff]
    %v48 = vld [vmem:[%s2 + $0xc8] sm:$0xff]
    %v49 = vld [vmem:[%s2 + $0xd0] sm:$0xff]
    %v50 = vld [vmem:[%s2 + $0xd8] sm:$0xff]
    %v51 = vld [vmem:[%s2 + $0xe0] sm:$0xff]
    %v52 = vld [vmem:[%s2 + $0xe8] sm:$0xff]
    %v53 = vld [vmem:[%s2 + $0xf0] sm:$0xff]
    %v54 = vld [vmem:[%s2 + $0xf8] sm:$0xff]
    %v55 = vmul.f32 %v15, %v15
    %v56 = vmul.f32 %v16, %v16
    %v57 = vmul.f32 %v17, %v17
    %v58 = vmul.f32 %v18, %v18
    %v59 = vmul.f32 %v19, %v19
    %v60 = vmul.f32 %v20, %v20
    %v61 = vmul.f32 %v21, %v21
    %v62 = vmul.f32 %v22, %v22
    %v63 = vmul.f32 %v15, %v19
    %v64 = vmul.f32 %v16, %v20
    %v65 = vmul.f32 %v17, %v21
    %v66 = vmul.f32 %v18, %v22
    %67 = vmatprep.subr.mxu0 0.0
    %68 = vmatpush1.msra.mxu0 %v38
    %69 = vmatprep.subr.mxu0 0.0
    %70 = vmatpush1.msra.mxu0 %v37
    %71 = vmatprep.subr.mxu0 0.0
    %72 = vmatpush1.msra.mxu0 %v36
    %73 = vmatprep.subr.mxu0 0.0
    %74 = vmatpush1.msra.mxu0 %v35
    %75 = vmatprep.subr.mxu0 0.0
    %76 = vmatpush1.msra.mxu0 %v34
    %77 = vmatprep.subr.mxu0 0.0
    %78 = vmatpush1.msra.mxu0 %v33
    %79 = vmatprep.subr.mxu0 0.0
    %80 = vmatpush1.msra.mxu0 %v32
    %81 = vmatprep.subr.mxu0 0.0
    %82 = vmatpush1.msra.mxu0 %v31
    %83 = vmatprep.subr.mxu0 0.0
    %84 = vmatpush1.msra.mxu0 %v30
    %85 = vmatprep.subr.mxu0 0.0
    %86 = vmatpush1.msra.mxu0 %v29
    %87 = vmatprep.subr.mxu0 0.0
    %88 = vmatpush1.msra.mxu0 %v28
    %89 = vmatprep.subr.mxu0 0.0
    %90 = vmatpush1.msra.mxu0 %v27
    %91 = vmatprep.subr.mxu0 0.0
    %92 = vmatpush1.msra.mxu0 %v26
    %93 = vmatprep.subr.mxu0 0.0
    %94 = vmatpush1.msra.mxu0 %v25
    %95 = vmatprep.subr.mxu0 0.0
    %96 = vmatpush1.msra.mxu0 %v24
    %97 = vmatprep.subr.mxu0 0.0
    %98 = vmatpush1.msra.mxu0 %v23
    %99 = vmatprep.subr.mxu0 0.0
    %100 = vmatpush2.msra.mxu0 %v54
    %101 = vmatprep.subr.mxu0 0.0
    %102 = vmatpush2.msra.mxu0 %v53
    %103 = vmatprep.subr.mxu0 0.0
    %104 = vmatpush2.msra.mxu0 %v52
    %105 = vmatprep.subr.mxu0 0.0
    %106 = vmatpush2.msra.mxu0 %v51
    %107 = vmatprep.subr.mxu0 0.0
    %108 = vmatpush2.msra.mxu0 %v50
    %109 = vmatprep.subr.mxu0 0.0
    %110 = vmatpush2.msra.mxu0 %v49
    %111 = vmatprep.subr.mxu0 0.0
    %112 = vmatpush2.msra.mxu0 %v48
    %113 = vmatprep.subr.mxu0 0.0
    %114 = vmatpush2.msra.mxu0 %v47
    %115 = vmatprep.subr.mxu0 0.0
    %116 = vmatpush2.msra.mxu0 %v46
    %117 = vmatprep.subr.mxu0 0.0
    %118 = vmatpush2.msra.mxu0 %v45
    %119 = vmatprep.subr.mxu0 0.0
    %120 = vmatpush2.msra.mxu0 %v44
    %121 = vmatprep.subr.mxu0 0.0
    %122 = vmatpush2.msra.mxu0 %v43
    %123 = vmatprep.subr.mxu0 0.0
    %124 = vmatpush2.msra.mxu0 %v42
    %125 = vmatprep.subr.mxu0 0.0
    %126 = vmatpush2.msra.mxu0 %v41
    %127 = vmatprep.subr.mxu0 0.0
    %128 = vmatpush2.msra.mxu0 %v40
    %129 = vmatprep.subr.mxu0 0.0
    %130 = vmatpush2.msra.mxu0 %v39
    %131 = vmatprep.mubr.f32.mxu0 %v16
    %132 = vmatmul.mubr.f32.gmra.mxu0 %v15
    %v133 = vpop.f32.mrf.mxu0
    %v134 = vadd.f32 0.0, %v133
    %v135 = vpop.f32.mrf.mxu0
    %136 = vmatprep.mubr.f32.mxu0 %v18
    %137 = vmatmul.mubr.f32.gmra.mxu0 %v17
    %v138 = vpop.f32.mrf.mxu0
    %v139 = vadd.f32 0.0, %v138
    %v140 = vpop.f32.mrf.mxu0
    %141 = vmatprep.mubr.f32.mxu0 %v20
    %142 = vmatmul.mubr.f32.gmra.mxu0 %v19
    %v143 = vpop.f32.mrf.mxu0
    %v144 = vadd.f32 0.0, %v143
    %v145 = vpop.f32.mrf.mxu0
    %146 = vmatprep.mubr.f32.mxu0 %v22
    %147 = vmatmul.mubr.f32.gmra.mxu0 %v21
    %v148 = vpop.f32.mrf.mxu0
    %v149 = vadd.f32 0.0, %v148
    %v150 = vpop.f32.mrf.mxu0
    %151 = vmatprep.mubr.f32.mxu0 %v56
    %152 = vmatmul.mubr.f32.gmra.mxu0 %v55
    %v153 = vpop.f32.mrf.mxu0
    %v154 = vadd.f32 0.0, %v153
    %v155 = vpop.f32.mrf.mxu0
    %156 = vmatprep.mubr.f32.mxu0 %v58
    %157 = vmatmul.mubr.f32.gmra.mxu0 %v57
    %v158 = vpop.f32.mrf.mxu0
    %v159 = vadd.f32 0.0, %v158
    %v160 = vpop.f32.mrf.mxu0
    %161 = vmatprep.mubr.f32.mxu0 %v60
    %162 = vmatmul.mubr.f32.gmra.mxu0 %v59
    %v163 = vpop.f32.mrf.mxu0
    %v164 = vadd.f32 0.0, %v163
    %v165 = vpop.f32.mrf.mxu0
    %166 = vmatprep.mubr.f32.mxu0 %v62
    %167 = vmatmul.mubr.f32.gmra.mxu0 %v61
    %v168 = vpop.f32.mrf.mxu0
    %v169 = vadd.f32 0.0, %v168
    %v170 = vpop.f32.mrf.mxu0
    %171 = vmatprep.mubr.f32.mxu0 %v64
    %172 = vmatmul.mubr.f32.gmra.mxu0 %v63
    %v173 = vpop.f32.mrf.mxu0
    %v174 = vadd.f32 0.0, %v173
    %v175 = vpop.f32.mrf.mxu0
    %176 = vmatprep.mubr.f32.mxu0 %v66
    %177 = vmatmul.mubr.f32.gmra.mxu0 %v65
    %v178 = vpop.f32.mrf.mxu0
    %v179 = vadd.f32 0.0, %v178
    %v180 = vpop.f32.mrf.mxu0
    %181 = vdwg.mxu0
    %v182 = vmul.f32 %v134, %v134
    %v183 = vmul.f32 %v139, %v139
    %v184 = vmul.f32 %v144, %v144
    %v185 = vmul.f32 %v149, %v149
    %v186 = vmul.f32 %v134, %v144
    %v187 = vmul.f32 %v139, %v149
    %v188 = vsub.f32 %v154, %v182
    %v189 = vsub.f32 %v159, %v183
    %v190 = vsub.f32 %v164, %v184
    %v191 = vsub.f32 %v169, %v185
    %v192 = vsub.f32 %v174, %v186
    %v193 = vsub.f32 %v179, %v187
    %v194 = vmul.f32 %v192, 2.0
    %v195 = vmul.f32 %v193, 2.0
    %v196 = vadd.f32 %v194, 0.0009
    %v197 = vadd.f32 %v195, 0.0009
    %v198 = vadd.f32 %v188, %v190
    %v199 = vadd.f32 %v189, %v191
    %v200 = vadd.f32 %v198, 0.0009
    %v201 = vadd.f32 %v199, 0.0009
    %v202 = vrcp.pop %v200
    %v203 = vmul.f32 %v196, %v202
    %v204 = vrcp.pop %v201
    %v205 = vmul.f32 %v197, %v204
    %v206 = vmul.f32 %v186, 2.0
    %v207 = vmul.f32 %v187, 2.0
    %v208 = vadd.f32 %v206, 0.0001
    %v209 = vadd.f32 %v207, 0.0001
    %v210 = vadd.f32 %v182, %v184
    %v211 = vadd.f32 %v183, %v185
    %v212 = vadd.f32 %v210, 0.0001
    %v213 = vadd.f32 %v211, 0.0001
    %v214 = vrcp.pop %v212
    %v215 = vmul.f32 %v208, %v214
    %v216 = vrcp.pop %v213
    %v217 = vmul.f32 %v209, %v216
    %v218 = vmul.f32 %v215, %v203
    %v219 = vmul.f32 %v217, %v205
    %vm220 = vcmask 293888
    %v221 = vsel %vm220, %v218, 0.0
    %222 = vadd.xlane.f32.xlu0 %v221
    %v223 = vpop.xlane.xlu0 %222
    %v224 = vsel %vm220, %v219, 0.0
    %225 = vadd.xlane.f32.xlu0 %v224
    %v226 = vpop.xlane.xlu0 %225
    %v227 = vmul.f32 %v223, 0.027777778
    %v228 = vmul.f32 %v226, 0.027777778
    %v229 = vmax.f32 %v227, 0.0
    %v230 = vmax.f32 %v228, 0.0
    %v233 = vlaneseq
    %v234 = vand.u32 %v233, 127
    %v235 = vlaneseq
    %v236 = vshrl.u32 %v235, 7
    %v237 = vsub.s32 %v234, %v236
    %v238 = vrot.slane %v229, %v237
    %v239 = vlaneseq
    %v240 = vshrl.u32 %v239, 7
    %v241 = vsub.s32 %v234, %v240
    %v242 = vrot.slane %v230, %v241
    %vm243 = vcmask 1041409
    %v244 = vsel %vm243, %v242, %v238
    %vm246 = vcmask 58368
    %247 = vst.msk [vmem:[#allocation2] sm:$0x3] %vm246, %v244
    // Predicated region
    $region14: #{tpu_custom_call.1} parent=1 // pred_check
      _
    $region15: #{tpu_custom_call.1} parent=1 // pred_check_branch
      %249 = sbr.rel (0) target = $region17
    $region16: #{tpu_custom_call.1} parent=1 // pred_region
      %s251 = ssub.s32 32, 32
      %252 = vsyncadd [#allocation3], %s251
      %s254 = sshll.u32 [#allocation2], 4
      %s255 = int_to_ptr.vmem [resolvable:$true] %s254
      %257 = dma.vmem_to_hbm [thread:$0]  %s255, 32, %s3, [#allocation3]
    $region17: #{tpu_custom_call.1} parent=1 // pred_fallthru
      _
    // Predicated region
    $region18: #{tpu_custom_call.1} parent=1 // pred_check
      _
    $region19: #{tpu_custom_call.1} parent=1 // pred_check_branch
      %259 = sbr.rel (0) target = $region21
    $region20: #{tpu_custom_call.1} parent=1 // pred_region
      %260 = dma.done [#allocation3], 32
    $region21: #{tpu_custom_call.1} parent=1 // pred_fallthru
      _
    %261 = vsyncpa [#allocation3], 1

</llo_original>
